<compile_context>
chip_gen: v6e
topology: v6e:2x2x1
jax: 0.10.0
libtpu: 0.0.40
codegen_flags: <defaults>
</compile_context>

<pallas_src>
import jax
import jax.numpy as jnp
from jax.experimental import pallas as pl
from jax.experimental.pallas import tpu as pltpu


LANE = 128          # lane width
TB_MAX = 4096       # max batch lanes per grid step (DMA block size); sweepable
CHUNK_MAX = 512     # max batch lanes per in-kernel compute chunk (vreg pressure)
NUM_FIELDS = 8      # packed params: w_in, b_in, w2, b2, w3, b3, w_out, b_out
FIELD = 128         # lane stride of each field inside the packed slab


def _round_up(n, m):
    return ((n + m - 1) // m) * m


def _choose_tiling(batch):
    """Returns (tb, chunk, n_tiles): batch lanes per grid step, lanes per
    in-kernel chunk, and number of grid steps."""
    b = _round_up(max(batch, 1), LANE)
    n_tiles = -(-b // TB_MAX)
    if n_tiles == 1 and b >= 2048:
        n_tiles = 2                       # v7x: give the second TensorCore work
    if n_tiles > 1 and n_tiles % 2:
        n_tiles += 1                      # even tile count -> balanced TC split
    tb = _round_up(-(-b // n_tiles), LANE)
    # Largest multiple of 128 <= CHUNK_MAX that divides tb.
    chunk = LANE
    c = LANE
    while c <= min(tb, CHUNK_MAX):
        if tb % c == 0:
            chunk = c
        c += LANE
    return tb, chunk, n_tiles


def mlp_kernel(x_ref, p_ref, o_ref):
    # x_ref: (n_chunks, D, chunk)  -- batch on the lane axis, chunks leading
    # p_ref: (H, NUM_FIELDS*FIELD) -- packed weights/biases, lane-aligned fields
    # o_ref: (n_chunks, 1, chunk)
    n_chunks, D, _ = x_ref.shape
    H = p_ref.shape[0]
    F = FIELD

    def body(c):
        x = x_ref[c]                                   # (D, chunk)
        w_in = p_ref[:, 0 * F:0 * F + D]               # (H, D)
        b_in = p_ref[:, 1 * F:1 * F + 1]               # (H, 1)
        w2 = p_ref[:, 2 * F:2 * F + H]                 # (H, H)
        b2 = p_ref[:, 3 * F:3 * F + 1]
        w3 = p_ref[:, 4 * F:4 * F + H]                 # (H, H)
        b3 = p_ref[:, 5 * F:5 * F + 1]
        w_o = p_ref[:, 6 * F:6 * F + 1]                # (H, 1) fc_out weight column
        b_o = p_ref[0:1, 7 * F:7 * F + 1]              # (1, 1)

        if D == 1:
            # K=1 matmul is an outer product: VPU broadcast multiply instead of
            # a degenerate MXU push/pop.
            h = w_in * x                               # (H,1)*(1,chunk) -> (H,chunk)
        else:
            h = jnp.dot(w_in, x, preferred_element_type=jnp.float32)
        h = jnp.tanh(h + b_in)
        h = jnp.tanh(jnp.dot(w2, h, preferred_element_type=jnp.float32) + b2)
        h = jnp.tanh(jnp.dot(w3, h, preferred_element_type=jnp.float32) + b3)
        # Output width 1: weighted sum -> VPU multiply + sublane reduce (XLU).
        u = jnp.sum(w_o * h, axis=0, keepdims=True) + b_o      # (1, chunk)
        o_ref[c] = u.astype(o_ref.dtype)

    if n_chunks == 1:
        body(0)
    else:
        # Real loop (scf.for) bounds live vreg ranges per chunk (v5e-friendly).
        @pl.loop(0, n_chunks)
        def _(c):
            body(c)


def fully_connected_network(x, p_slab):
    """x: (B, input_dim) float32, p_slab: packed params -> (B, 1) float32."""
    B, D = x.shape
    H = p_slab.shape[0]
    tb, chunk, n_tiles = _choose_tiling(B)
    B_pad = tb * n_tiles
    n_chunks = tb // chunk          # chunks per grid step
    n_total = B_pad // chunk        # total chunks

    # Batch on the lane axis; pre-split into lane-aligned chunks on a leading
    # axis so in-kernel dynamic indexing never touches the lane dimension.
    x_pad = jnp.pad(x.T, ((0, 0), (0, B_pad - B)))                 # (D, B_pad)
    x_blk = x_pad.reshape(D, n_total, chunk).transpose(1, 0, 2)    # (n_total, D, chunk)

    out = pl.pallas_call(
        mlp_kernel,
        out_shape=jax.ShapeDtypeStruct((n_total, 1, chunk), jnp.float32),
        grid=(n_tiles,),
        in_specs=[
            pl.BlockSpec((n_chunks, D, chunk), lambda i: (i, 0, 0)),
            # Single packed slab, constant index map -> one DMA, VMEM-resident
            # across all grid steps.
            pl.BlockSpec((H, NUM_FIELDS * FIELD), lambda i: (0, 0)),
        ],
        out_specs=pl.BlockSpec((n_chunks, 1, chunk), lambda i: (i, 0, 0)),
        compiler_params=pltpu.CompilerParams(
            dimension_semantics=("parallel",)),   # shard batch tiles across TCs (v7x)
    )(x_blk, p_slab)

    # (n_total, 1, chunk) -> flat padded batch -> drop padding -> (B, 1)
    return out.reshape(-1)[:B][:, None]


def init_params(key, input_dim=1, hidden_size=20):
    """PyTorch nn.Linear default init (uniform +-1/sqrt(fan_in)).
    Weights in PyTorch (out_features, in_features) layout, biases (out_features,)."""
    def linear(k, fan_in, fan_out):
        kw, kb = jax.random.split(k)
        bound = 1.0 / jnp.sqrt(jnp.float32(fan_in))
        w = jax.random.uniform(kw, (fan_out, fan_in), jnp.float32, -bound, bound)
        b = jax.random.uniform(kb, (fan_out,), jnp.float32, -bound, bound)
        return w, b

    k1, k2, k3, k4 = jax.random.split(key, 4)
    w_in, b_in = linear(k1, input_dim, hidden_size)
    w2, b2 = linear(k2, hidden_size, hidden_size)
    w3, b3 = linear(k3, hidden_size, hidden_size)
    w_out, b_out = linear(k4, hidden_size, 1)
    return (w_in, b_in, w2, b2, w3, b3, w_out, b_out)


def pack_params(raw_params):
    """Pack all 8 params into one (H, 8*128) f32 slab; each param lives in its
    own 128-lane field so every in-kernel slice is lane-aligned."""
    w_in, b_in, w2, b2, w3, b3, w_out, b_out = raw_params
    H, D = w_in.shape
    assert D <= FIELD and H <= FIELD, "fields hold at most 128 lanes"
    F = FIELD
    slab = jnp.zeros((H, NUM_FIELDS * F), jnp.float32)
    slab = slab.at[:, 0 * F:0 * F + D].set(w_in)
    slab = slab.at[:, 1 * F:1 * F + 1].set(b_in[:, None])
    slab = slab.at[:, 2 * F:2 * F + H].set(w2)
    slab = slab.at[:, 3 * F:3 * F + 1].set(b2[:, None])
    slab = slab.at[:, 4 * F:4 * F + H].set(w3)
    slab = slab.at[:, 5 * F:5 * F + 1].set(b3[:, None])
    slab = slab.at[:, 6 * F:6 * F + 1].set(w_out.T)     # fc_out weight as a column
    slab = slab.at[0, 7 * F].set(b_out[0])
    return slab


def reference_forward(x, raw_params):
    w_in, b_in, w2, b2, w3, b3, w_out, b_out = raw_params
    h = jnp.tanh(x @ w_in.T + b_in)
    h = jnp.tanh(h @ w2.T + b2)
    h = jnp.tanh(h @ w3.T + b3)
    return h @ w_out.T + b_out


if __name__ == "__main__":
    key = jax.random.PRNGKey(0)
    kx, kp = jax.random.split(key)

    input_dim = 1
    hidden_size = 20
    raw = init_params(kp, input_dim=input_dim, hidden_size=hidden_size)
    p_slab = pack_params(raw)

    # Small shape consistent with the module (PINN-style scalar input).
    batch = 8
    x = jax.random.normal(kx, (batch, input_dim), dtype=jnp.float32)
    u_theta = jax.block_until_ready(fully_connected_network(x, p_slab))
    ref = reference_forward(x, raw)
    assert u_theta.shape == (batch, 1)
    assert jnp.allclose(u_theta, ref, atol=2e-5, rtol=2e-5)

    # Larger batch that doesn't divide the tile: exercises padding, the 2-step
    # parallel grid, the in-kernel chunk loop, and resident-weight reuse.
    batch2 = 2500
    x2 = jax.random.normal(kx, (batch2, input_dim), dtype=jnp.float32)
    u2 = jax.block_until_ready(fully_connected_network(x2, p_slab))
    ref2 = reference_forward(x2, raw)
    assert u2.shape == (batch2, 1)
    assert jnp.allclose(u2, ref2, atol=2e-5, rtol=2e-5)

    print("KERNEL_OK")
</pallas_src>

<mosaic_0001>
module attributes {stable_mosaic.version = 11 : i64} {
  func.func @mlp_kernel(%arg0: i32, %arg1: memref<1x1x128xf32, #tpu.memory_space<vmem>>, %arg2: memref<20x1024xf32, #tpu.memory_space<vmem>>, %arg3: memref<1x1x128xf32, #tpu.memory_space<vmem>>) attributes {dimension_semantics = [#tpu.dimension_semantics<parallel>], iteration_bounds = array<i64: 1>, scalar_prefetch = 0 : i64, scratch_operands = 0 : i64, tpu.core_type = #tpu.core_type<tc>, window_params = [{transform_indices = @transform_0, window_bounds = array<i64: 1, 1, 128>}, {pipeline_mode = #tpu.pipeline_mode<synchronous>, transform_indices = @transform_1, window_bounds = array<i64: 20, 1024>}, {transform_indices = @transform_2, window_bounds = array<i64: 1, 1, 128>}]} {
    %c0 = arith.constant 0 : index
    %c0_0 = arith.constant 0 : index
    %c0_1 = arith.constant 0 : index
    %0 = vector.load %arg1[%c0, %c0_0, %c0_1] : memref<1x1x128xf32, #tpu.memory_space<vmem>>, vector<1x1x128xf32>
    %1 = vector.shape_cast %0 : vector<1x1x128xf32> to vector<1x128xf32>
    %c0_2 = arith.constant 0 : index
    %c0_3 = arith.constant 0 : index
    %2 = vector.load %arg2[%c0_2, %c0_3] : memref<20x1024xf32, #tpu.memory_space<vmem>>, vector<20x1xf32>
    %c0_4 = arith.constant 0 : index
    %c128 = arith.constant 128 : index
    %3 = vector.load %arg2[%c0_4, %c128] : memref<20x1024xf32, #tpu.memory_space<vmem>>, vector<20x1xf32>
    %c0_5 = arith.constant 0 : index
    %c256 = arith.constant 256 : index
    %4 = vector.load %arg2[%c0_5, %c256] : memref<20x1024xf32, #tpu.memory_space<vmem>>, vector<20x20xf32>
    %c0_6 = arith.constant 0 : index
    %c384 = arith.constant 384 : index
    %5 = vector.load %arg2[%c0_6, %c384] : memref<20x1024xf32, #tpu.memory_space<vmem>>, vector<20x1xf32>
    %c0_7 = arith.constant 0 : index
    %c512 = arith.constant 512 : index
    %6 = vector.load %arg2[%c0_7, %c512] : memref<20x1024xf32, #tpu.memory_space<vmem>>, vector<20x20xf32>
    %c0_8 = arith.constant 0 : index
    %c640 = arith.constant 640 : index
    %7 = vector.load %arg2[%c0_8, %c640] : memref<20x1024xf32, #tpu.memory_space<vmem>>, vector<20x1xf32>
    %c0_9 = arith.constant 0 : index
    %c768 = arith.constant 768 : index
    %8 = vector.load %arg2[%c0_9, %c768] : memref<20x1024xf32, #tpu.memory_space<vmem>>, vector<20x1xf32>
    %c0_10 = arith.constant 0 : index
    %c896 = arith.constant 896 : index
    %9 = vector.load %arg2[%c0_10, %c896] : memref<20x1024xf32, #tpu.memory_space<vmem>>, vector<1x1xf32>
    %10 = vector.broadcast %2 : vector<20x1xf32> to vector<20x128xf32>
    %11 = vector.broadcast %1 : vector<1x128xf32> to vector<20x128xf32>
    %12 = arith.mulf %10, %11 : vector<20x128xf32>
    %13 = vector.broadcast %3 : vector<20x1xf32> to vector<20x128xf32>
    %14 = arith.addf %12, %13 : vector<20x128xf32>
    %15 = math.tanh %14 : vector<20x128xf32>
    %cst = arith.constant dense<0.000000e+00> : vector<20x128xf32>
    %16 = tpu.matmul %4, %15, %cst {dimension_numbers = #tpu.dot_dimension_numbers<[1], [0], [0], [1], [0, 0, 1, 1], [], []>} : vector<20x20xf32>, vector<20x128xf32>, vector<20x128xf32> -> vector<20x128xf32>
    %17 = vector.broadcast %5 : vector<20x1xf32> to vector<20x128xf32>
    %18 = arith.addf %16, %17 : vector<20x128xf32>
    %19 = math.tanh %18 : vector<20x128xf32>
    %cst_11 = arith.constant dense<0.000000e+00> : vector<20x128xf32>
    %20 = tpu.matmul %6, %19, %cst_11 {dimension_numbers = #tpu.dot_dimension_numbers<[1], [0], [0], [1], [0, 0, 1, 1], [], []>} : vector<20x20xf32>, vector<20x128xf32>, vector<20x128xf32> -> vector<20x128xf32>
    %21 = vector.broadcast %7 : vector<20x1xf32> to vector<20x128xf32>
    %22 = arith.addf %20, %21 : vector<20x128xf32>
    %23 = math.tanh %22 : vector<20x128xf32>
    %24 = vector.broadcast %8 : vector<20x1xf32> to vector<20x128xf32>
    %25 = arith.mulf %24, %23 : vector<20x128xf32>
    %cst_12 = arith.constant dense<0.000000e+00> : vector<128xf32>
    %26 = vector.multi_reduction <add>, %25, %cst_12 [0] : vector<20x128xf32> to vector<128xf32>
    %27 = vector.shape_cast %26 : vector<128xf32> to vector<1x128xf32>
    %28 = vector.broadcast %9 : vector<1x1xf32> to vector<1x128xf32>
    %29 = arith.addf %27, %28 : vector<1x128xf32>
    %c0_13 = arith.constant 0 : index
    %c0_14 = arith.constant 0 : index
    %c0_15 = arith.constant 0 : index
    %30 = vector.load %arg3[%c0_13, %c0_14, %c0_15] : memref<1x1x128xf32, #tpu.memory_space<vmem>>, vector<1x1x128xf32>
    %31 = vector.shape_cast %30 : vector<1x1x128xf32> to vector<1x128xf32>
    %32 = vector.shape_cast %29 : vector<1x128xf32> to vector<1x1x128xf32>
    tpu.vector_store %arg3[%c0_13, %c0_14, %c0_15], %32 {strides = array<i32>} : memref<1x1x128xf32, #tpu.memory_space<vmem>>, vector<1x1x128xf32>,
    return
  }
  func.func @transform_0(%arg0: i32) -> (i32, i32, i32) {
    %c0_i32 = arith.constant 0 : i32
    %c0_i32_0 = arith.constant 0 : i32
    %c0_i32_1 = arith.constant 0 : i32
    return %arg0, %c0_i32, %c0_i32_0 : i32, i32, i32
  }
  func.func @transform_1(%arg0: i32) -> (i32, i32) {
    %c0_i32 = arith.constant 0 : i32
    %c0_i32_0 = arith.constant 0 : i32
    %c0_i32_1 = arith.constant 0 : i32
    return %c0_i32, %c0_i32_0 : i32, i32
  }
  func.func @transform_2(%arg0: i32) -> (i32, i32, i32) {
    %c0_i32 = arith.constant 0 : i32
    %c0_i32_0 = arith.constant 0 : i32
    %c0_i32_1 = arith.constant 0 : i32
    return %arg0, %c0_i32, %c0_i32_0 : i32, i32, i32
  }
}

</mosaic_0001>

<llo_original>
// kernel: tpu_custom_call.1
$region0: #{tpu_custom_call.1}
  #allocation0 [shape = 'u32[]', space=smem, size = 0x4, offset = 0x4, fixed_abs, tag = 'smem constant byte address 0x4 - core index']
  #allocation1 [shape = 'u32[144,128]{1,0:T(1,128)}', space=vmem, size = 0x12000, scoped, tag = 'internal scratch']
  %s0 = inlined_call_operand.hbm [shape: f32[1,1,128], index: 0, kind: input, shape index: {}]
  %s1 = inlined_call_operand.hbm [shape: f32[20,1024], index: 1, kind: input, shape index: {}]
  %s2 = inlined_call_operand.hbm [shape: f32[1,1,128], index: 2, kind: output, shape index: {}]
  %s3 = sld [smem:[#allocation0]]
  $region26: #{tpu_custom_call.1} parent=0
    _
  %s5 = ssub.s32 1, %s3
  %s6 = scalar_select 0, %s5, %s3
  $region1: #{tpu_custom_call.1} parent=0
    #allocation2 [shape = 'u8[512]{0}', space=vmem, size = 0x400, scoped, tag = 'input window, operand 0, single buffered']
    #allocation3 [shape = 's32[1]{0}', space=sflag, size = 0x4, scoped, tag = 'scoped memory for tpu_custom_call.1']
    #allocation4 [shape = 's32[1]{0}', space=sflag, size = 0x4, scoped, tag = 'scoped memory for tpu_custom_call.1']
    #allocation5 [shape = 'u8[98304]{0}', space=vmem, size = 0x18000, scoped, tag = 'input window, operand 1, single buffered']
    #allocation6 [shape = 's32[1]{0}', space=sflag, size = 0x4, scoped, tag = 'scoped memory for tpu_custom_call.1']
    #allocation7 [shape = 'u8[512]{0}', space=vmem, size = 0x400, scoped, tag = 'output window, operand 0, single buffered']
    %7 = vsyncpa [#allocation3], 0
    %8 = vsyncpa [#allocation6], 0
    %9 = vsyncpa [#allocation4], 0
    // Predicated region
    $region2: #{tpu_custom_call.1} parent=1 // pred_check
      _
    $region3: #{tpu_custom_call.1} parent=1 // pred_check_branch
      %11 = sbr.rel (0) target = $region5
    $region4: #{tpu_custom_call.1} parent=1 // pred_region
      %s13 = ssub.s32 16, 16
      %14 = vsyncadd [#allocation3], %s13
      %s16 = sshll.u32 [#allocation2], 4
      %s17 = int_to_ptr.vmem [resolvable:$true] %s16
      %19 = dma.hbm_to_vmem [thread:$0]  %s0, 16, %s17, [#allocation3]
    $region5: #{tpu_custom_call.1} parent=1 // pred_fallthru
      _
    // Predicated region
    $region6: #{tpu_custom_call.1} parent=1 // pred_check
      _
    $region7: #{tpu_custom_call.1} parent=1 // pred_check_branch
      %21 = sbr.rel (0) target = $region9
    $region8: #{tpu_custom_call.1} parent=1 // pred_region
      %s23 = ssub.s32 3072, 3072
      %24 = vsyncadd [#allocation6], %s23
      %s25 = sshll.u32 [#allocation5], 4
      %s26 = int_to_ptr.vmem [resolvable:$true] %s25
      %31 = dma.hbm_to_vmem [thread:$0]  %s1, 3072, %s26, [#allocation6], 1024, 1024, 64
    $region9: #{tpu_custom_call.1} parent=1 // pred_fallthru
      _
    // Predicated region
    $region10: #{tpu_custom_call.1} parent=1 // pred_check
      _
    $region11: #{tpu_custom_call.1} parent=1 // pred_check_branch
      %33 = sbr.rel (0) target = $region13
    $region12: #{tpu_custom_call.1} parent=1 // pred_region
      %34 = dma.done [#allocation3], 16
    $region13: #{tpu_custom_call.1} parent=1 // pred_fallthru
      _
    // Predicated region
    $region14: #{tpu_custom_call.1} parent=1 // pred_check
      _
    $region15: #{tpu_custom_call.1} parent=1 // pred_check_branch
      %36 = sbr.rel (0) target = $region17
    $region16: #{tpu_custom_call.1} parent=1 // pred_region
      %37 = dma.done [#allocation6], 3072
    $region17: #{tpu_custom_call.1} parent=1 // pred_fallthru
      _
    %v38 = vld [vmem:[#allocation2] sm:$0x1]
    %v39 = vld [vmem:[#allocation5] sm:$0xff]
    %v40 = vld [vmem:[#allocation5 + $0x40] sm:$0xff]
    %v41 = vld [vmem:[#allocation5 + $0x80] sm:$0xf]
    %v42 = vld [vmem:[#allocation5 + $0x8] sm:$0xff]
    %v43 = vld [vmem:[#allocation5 + $0x48] sm:$0xff]
    %v44 = vld [vmem:[#allocation5 + $0x88] sm:$0xf]
    %v45 = vld [vmem:[#allocation5 + $0x10] sm:$0xff]
    %v46 = vld [vmem:[#allocation5 + $0x50] sm:$0xff]
    %v47 = vld [vmem:[#allocation5 + $0x90] sm:$0xf]
    %v48 = vld [vmem:[#allocation5 + $0x18] sm:$0xff]
    %v49 = vld [vmem:[#allocation5 + $0x58] sm:$0xff]
    %v50 = vld [vmem:[#allocation5 + $0x98] sm:$0xf]
    %v51 = vld [vmem:[#allocation5 + $0x20] sm:$0xff]
    %v52 = vld [vmem:[#allocation5 + $0x60] sm:$0xff]
    %v53 = vld [vmem:[#allocation5 + $0xa0] sm:$0xf]
    %v54 = vld [vmem:[#allocation5 + $0x28] sm:$0xff]
    %v55 = vld [vmem:[#allocation5 + $0x68] sm:$0xff]
    %v56 = vld [vmem:[#allocation5 + $0xa8] sm:$0xf]
    %v57 = vld [vmem:[#allocation5 + $0x30] sm:$0xff]
    %v58 = vld [vmem:[#allocation5 + $0x70] sm:$0xff]
    %v59 = vld [vmem:[#allocation5 + $0xb0] sm:$0xf]
    %v60 = vld [vmem:[#allocation5 + $0x38] ss:$0 sm:$0xff]
    %62 = vset.pattern.permute.xlu0 0
    %63 = vperm.xlu0 %62, %v39
    %v64 = vpop.permute.xlu0 %63
    %67 = vset.pattern.permute.xlu0 0
    %68 = vperm.xlu0 %67, %v40
    %v69 = vpop.permute.xlu0 %68
    %72 = vset.pattern.permute.xlu0 0
    %73 = vperm.xlu0 %72, %v41
    %v74 = vpop.permute.xlu0 %73
    %v77 = vlaneseq
    %v78 = vshrl.u32 %v77, 7
    %v79 = vsub.s32 0, %v78
    %v80 = vrot.slane %v38, %v79
    %v82 = vmul.f32 %v64, %v80
    %v83 = vmul.f32 %v69, %v80
    %v84 = vmul.f32 %v74, %v80
    %86 = vset.pattern.permute.xlu0 0
    %87 = vperm.xlu0 %86, %v42
    %v88 = vpop.permute.xlu0 %87
    %91 = vset.pattern.permute.xlu0 0
    %92 = vperm.xlu0 %91, %v43
    %v93 = vpop.permute.xlu0 %92
    %96 = vset.pattern.permute.xlu0 0
    %97 = vperm.xlu0 %96, %v44
    %v98 = vpop.permute.xlu0 %97
    %v100 = vadd.f32 %v82, %v88
    %v101 = vadd.f32 %v83, %v93
    %v102 = vadd.f32 %v84, %v98
    %v103 = vtanh.pop %v100
    %v104 = vtanh.pop %v101
    %v105 = vtanh.pop %v102
    %107 = vset.pattern.permute.xlu0 0
    %108 = vperm.xlu0 %107, %v48
    %v109 = vpop.permute.xlu0 %108
    %112 = vset.pattern.permute.xlu0 0
    %113 = vperm.xlu0 %112, %v49
    %v114 = vpop.permute.xlu0 %113
    %117 = vset.pattern.permute.xlu0 0
    %118 = vperm.xlu0 %117, %v50
    %v119 = vpop.permute.xlu0 %118
    %vm121 = vcmask 162816
    %v123 = vsel %vm121, %v45, 0
    %v126 = vsel %vm121, %v46, 0
    %v129 = vsel %vm121, %v47, 0
    %vm131 = vcmask 1043456
    %v133 = vsel %vm131, %v105, 0
    %135 = vmatprep.subr.mxu0 0.0
    %136 = vmatpush1.msra.mxu0 0.0
    %137 = vmatprep.subr.mxu0 0.0
    %138 = vmatpush1.msra.mxu0 0.0
    %139 = vmatprep.subr.mxu0 0.0
    %140 = vmatpush1.msra.mxu0 0.0
    %141 = vmatprep.subr.mxu0 0.0
    %142 = vmatpush1.msra.mxu0 0.0
    %143 = vmatprep.subr.mxu0 0.0
    %144 = vmatpush1.msra.mxu0 0.0
    %145 = vmatprep.subr.mxu0 0.0
    %146 = vmatpush1.msra.mxu0 0.0
    %147 = vmatprep.subr.mxu0 0.0
    %148 = vmatpush1.msra.mxu0 0.0
    %149 = vmatprep.subr.mxu0 0.0
    %150 = vmatpush1.msra.mxu0 0.0
    %151 = vmatprep.subr.mxu0 0.0
    %152 = vmatpush1.msra.mxu0 0.0
    %153 = vmatprep.subr.mxu0 0.0
    %154 = vmatpush1.msra.mxu0 0.0
    %155 = vmatprep.subr.mxu0 0.0
    %156 = vmatpush1.msra.mxu0 0.0
    %157 = vmatprep.subr.mxu0 0.0
    %158 = vmatpush1.msra.mxu0 0.0
    %159 = vmatprep.subr.mxu0 0.0
    %160 = vmatpush1.msra.mxu0 0.0
    %161 = vmatprep.subr.mxu0 0.0
    %162 = vmatpush1.msra.mxu0 %v133
    %163 = vmatprep.subr.mxu0 0.0
    %164 = vmatpush1.msra.mxu0 %v104
    %165 = vmatprep.subr.mxu0 0.0
    %166 = vmatpush1.msra.mxu0 %v103
    %167 = vmatprep.subr.mxu0 0.0
    %168 = vmatpush2.msra.mxu0 0.0
    %169 = vmatprep.subr.mxu0 0.0
    %170 = vmatpush2.msra.mxu0 0.0
    %171 = vmatprep.subr.mxu0 0.0
    %172 = vmatpush2.msra.mxu0 0.0
    %173 = vmatprep.subr.mxu0 0.0
    %174 = vmatpush2.msra.mxu0 0.0
    %175 = vmatprep.subr.mxu0 0.0
    %176 = vmatpush2.msra.mxu0 0.0
    %177 = vmatprep.subr.mxu0 0.0
    %178 = vmatpush2.msra.mxu0 0.0
    %179 = vmatprep.subr.mxu0 0.0
    %180 = vmatpush2.msra.mxu0 0.0
    %181 = vmatprep.subr.mxu0 0.0
    %182 = vmatpush2.msra.mxu0 0.0
    %183 = vmatprep.subr.mxu0 0.0
    %184 = vmatpush2.msra.mxu0 0.0
    %185 = vmatprep.subr.mxu0 0.0
    %186 = vmatpush2.msra.mxu0 0.0
    %187 = vmatprep.subr.mxu0 0.0
    %188 = vmatpush2.msra.mxu0 0.0
    %189 = vmatprep.subr.mxu0 0.0
    %190 = vmatpush2.msra.mxu0 0.0
    %191 = vmatprep.subr.mxu0 0.0
    %192 = vmatpush2.msra.mxu0 0.0
    %193 = vmatprep.subr.mxu0 0.0
    %194 = vmatpush2.msra.mxu0 0.0
    %195 = vmatprep.subr.mxu0 0.0
    %196 = vmatpush2.msra.mxu0 0.0
    %197 = vmatprep.subr.mxu0 0.0
    %198 = vmatpush2.msra.mxu0 0.0
    %199 = vmatprep.mubr.f32.mxu0 0.0
    %200 = vmatmul.mubr.f32.gmra.mxu0 %v123
    %v201 = vpop.f32.mrf.mxu0
    %v202 = vadd.f32 %v109, %v201
    %v203 = vpop.f32.mrf.mxu0
    %204 = vmatprep.mubr.f32.mxu0 0.0
    %205 = vmatmul.mubr.f32.gmra.mxu0 %v126
    %v206 = vpop.f32.mrf.mxu0
    %v207 = vadd.f32 %v114, %v206
    %v208 = vpop.f32.mrf.mxu0
    %209 = vmatprep.mubr.f32.mxu0 0.0
    %210 = vmatmul.mubr.f32.gmra.mxu0 %v129
    %v211 = vpop.f32.mrf.mxu0
    %v212 = vadd.f32 %v119, %v211
    %v213 = vpop.f32.mrf.mxu0
    %214 = vdwg.mxu0
    %v215 = vtanh.pop %v202
    %v216 = vtanh.pop %v207
    %v217 = vtanh.pop %v212
    %219 = vset.pattern.permute.xlu0 0
    %220 = vperm.xlu0 %219, %v54
    %v221 = vpop.permute.xlu0 %220
    %224 = vset.pattern.permute.xlu0 0
    %225 = vperm.xlu0 %224, %v55
    %v226 = vpop.permute.xlu0 %225
    %229 = vset.pattern.permute.xlu0 0
    %230 = vperm.xlu0 %229, %v56
    %v231 = vpop.permute.xlu0 %230
    %v234 = vsel %vm121, %v51, 0
    %v237 = vsel %vm121, %v52, 0
    %v240 = vsel %vm121, %v53, 0
    %v243 = vsel %vm131, %v217, 0
    %245 = vmatprep.subr.mxu0 0.0
    %246 = vmatpush1.msra.mxu0 0.0
    %247 = vmatprep.subr.mxu0 0.0
    %248 = vmatpush1.msra.mxu0 0.0
    %249 = vmatprep.subr.mxu0 0.0
    %250 = vmatpush1.msra.mxu0 0.0
    %251 = vmatprep.subr.mxu0 0.0
    %252 = vmatpush1.msra.mxu0 0.0
    %253 = vmatprep.subr.mxu0 0.0
    %254 = vmatpush1.msra.mxu0 0.0
    %255 = vmatprep.subr.mxu0 0.0
    %256 = vmatpush1.msra.mxu0 0.0
    %257 = vmatprep.subr.mxu0 0.0
    %258 = vmatpush1.msra.mxu0 0.0
    %259 = vmatprep.subr.mxu0 0.0
    %260 = vmatpush1.msra.mxu0 0.0
    %261 = vmatprep.subr.mxu0 0.0
    %262 = vmatpush1.msra.mxu0 0.0
    %263 = vmatprep.subr.mxu0 0.0
    %264 = vmatpush1.msra.mxu0 0.0
    %265 = vmatprep.subr.mxu0 0.0
    %266 = vmatpush1.msra.mxu0 0.0
    %267 = vmatprep.subr.mxu0 0.0
    %268 = vmatpush1.msra.mxu0 0.0
    %269 = vmatprep.subr.mxu0 0.0
    %270 = vmatpush1.msra.mxu0 0.0
    %271 = vmatprep.subr.mxu0 0.0
    %272 = vmatpush1.msra.mxu0 %v243
    %273 = vmatprep.subr.mxu0 0.0
    %274 = vmatpush1.msra.mxu0 %v216
    %275 = vmatprep.subr.mxu0 0.0
    %276 = vmatpush1.msra.mxu0 %v215
    %277 = vmatprep.subr.mxu0 0.0
    %278 = vmatpush2.msra.mxu0 0.0
    %279 = vmatprep.subr.mxu0 0.0
    %280 = vmatpush2.msra.mxu0 0.0
    %281 = vmatprep.subr.mxu0 0.0
    %282 = vmatpush2.msra.mxu0 0.0
    %283 = vmatprep.subr.mxu0 0.0
    %284 = vmatpush2.msra.mxu0 0.0
    %285 = vmatprep.subr.mxu0 0.0
    %286 = vmatpush2.msra.mxu0 0.0
    %287 = vmatprep.subr.mxu0 0.0
    %288 = vmatpush2.msra.mxu0 0.0
    %289 = vmatprep.subr.mxu0 0.0
    %290 = vmatpush2.msra.mxu0 0.0
    %291 = vmatprep.subr.mxu0 0.0
    %292 = vmatpush2.msra.mxu0 0.0
    %293 = vmatprep.subr.mxu0 0.0
    %294 = vmatpush2.msra.mxu0 0.0
    %295 = vmatprep.subr.mxu0 0.0
    %296 = vmatpush2.msra.mxu0 0.0
    %297 = vmatprep.subr.mxu0 0.0
    %298 = vmatpush2.msra.mxu0 0.0
    %299 = vmatprep.subr.mxu0 0.0
    %300 = vmatpush2.msra.mxu0 0.0
    %301 = vmatprep.subr.mxu0 0.0
    %302 = vmatpush2.msra.mxu0 0.0
    %303 = vmatprep.subr.mxu0 0.0
    %304 = vmatpush2.msra.mxu0 0.0
    %305 = vmatprep.subr.mxu0 0.0
    %306 = vmatpush2.msra.mxu0 0.0
    %307 = vmatprep.subr.mxu0 0.0
    %308 = vmatpush2.msra.mxu0 0.0
    %309 = vmatprep.mubr.f32.mxu0 0.0
    %310 = vmatmul.mubr.f32.gmra.mxu0 %v234
    %v311 = vpop.f32.mrf.mxu0
    %v312 = vadd.f32 %v221, %v311
    %v313 = vpop.f32.mrf.mxu0
    %314 = vmatprep.mubr.f32.mxu0 0.0
    %315 = vmatmul.mubr.f32.gmra.mxu0 %v237
    %v316 = vpop.f32.mrf.mxu0
    %v317 = vadd.f32 %v226, %v316
    %v318 = vpop.f32.mrf.mxu0
    %319 = vmatprep.mubr.f32.mxu0 0.0
    %320 = vmatmul.mubr.f32.gmra.mxu0 %v240
    %v321 = vpop.f32.mrf.mxu0
    %v322 = vadd.f32 %v231, %v321
    %v323 = vpop.f32.mrf.mxu0
    %324 = vdwg.mxu0
    %v325 = vtanh.pop %v312
    %v326 = vtanh.pop %v317
    %v327 = vtanh.pop %v322
    %329 = vset.pattern.permute.xlu0 0
    %330 = vperm.xlu0 %329, %v57
    %v331 = vpop.permute.xlu0 %330
    %334 = vset.pattern.permute.xlu0 0
    %335 = vperm.xlu0 %334, %v58
    %v336 = vpop.permute.xlu0 %335
    %339 = vset.pattern.permute.xlu0 0
    %340 = vperm.xlu0 %339, %v59
    %v341 = vpop.permute.xlu0 %340
    %v343 = vmul.f32 %v331, %v325
    %v344 = vmul.f32 %v336, %v326
    %v345 = vmul.f32 %v341, %v327
    %v346 = vadd.f32 %v343, %v344
    %v347 = vsel %vm131, %v345, 0.0
    %v348 = vadd.f32 %v346, %v347
    %v349 = vrot.slane %v348, 4
    %v350 = vadd.f32 %v348, %v349
    %v351 = vrot.slane %v350, 2
    %v352 = vadd.f32 %v350, %v351
    %v353 = vrot.slane %v352, 1
    %v354 = vadd.f32 %v352, %v353
    %356 = vset.pattern.permute.xlu0 0
    %357 = vperm.xlu0 %356, %v60
    %v358 = vpop.permute.xlu0 %357
    %v360 = vadd.f32 %v354, %v358
    %361 = vst [vmem:[#allocation7] sm:$0x1] %v360
    // Predicated region
    $region18: #{tpu_custom_call.1} parent=1 // pred_check
      _
    $region19: #{tpu_custom_call.1} parent=1 // pred_check_branch
      %363 = sbr.rel (0) target = $region21
    $region20: #{tpu_custom_call.1} parent=1 // pred_region
      %s365 = ssub.s32 16, 16
      %366 = vsyncadd [#allocation4], %s365
      %s368 = sshll.u32 [#allocation7], 4
      %s369 = int_to_ptr.vmem [resolvable:$true] %s368
      %371 = dma.vmem_to_hbm [thread:$0]  %s369, 16, %s2, [#allocation4]
    $region21: #{tpu_custom_call.1} parent=1 // pred_fallthru
      _
    // Predicated region
    $region22: #{tpu_custom_call.1} parent=1 // pred_check
      _
    $region23: #{tpu_custom_call.1} parent=1 // pred_check_branch
      %373 = sbr.rel (0) target = $region25
    $region24: #{tpu_custom_call.1} parent=1 // pred_region
      %374 = dma.done [#allocation4], 16
    $region25: #{tpu_custom_call.1} parent=1 // pred_fallthru
      _
    %375 = vsyncpa [#allocation3], 1
    %376 = vsyncpa [#allocation6], 1
    %377 = vsyncpa [#allocation4], 1

</llo_original>
